<compile_context>
chip_gen: v7x
topology: tpu7x:2x2x1
jax: 0.10.0
libtpu: 0.0.40
codegen_flags: <defaults>
</compile_context>

<pallas_src>
import functools

import jax
import jax.numpy as jnp
from jax.experimental import pallas as pl
from jax.experimental.pallas import tpu as pltpu


def _round_up(n: int, m: int) -> int:
    return ((n + m - 1) // m) * m


def _sublane_multiple(dtype) -> int:
    # Native sublane packing: 8 rows for 32-bit, 16 for bf16, 32 for int8/fp8.
    return max(8, 32 // jnp.dtype(dtype).itemsize)


def _physical_vmem_bytes() -> int:
    try:
        return int(pltpu.get_tpu_info().vmem_capacity_bytes)
    except Exception:
        return 64 * 1024 * 1024  # conservative: v7x per-TensorCore VMEM


def sequential_mlp_kernel(x_ref, w1_ref, b1_ref, w2_ref, b2_ref, o_ref):
    # layer 0: Linear(D_in -> D_hid) — bf16 operands, f32 accumulation on MXU
    h = jnp.dot(x_ref[...], w1_ref[...], preferred_element_type=jnp.float32)
    # layer 1: ReLU — f32 epilogue on the accumulator
    h = jnp.maximum(h + b1_ref[...], 0.0)
    # layer 2: Linear(D_hid -> D_out) — downcast intermediate to bf16 for MXU
    y = jnp.dot(h.astype(w2_ref.dtype), w2_ref[...],
                preferred_element_type=jnp.float32)
    o_ref[...] = (y + b2_ref[...]).astype(o_ref.dtype)


def pad_sequential_params(w1, b1, w2, b2, compute_dtype=jnp.bfloat16):
    """Pad feature dims to multiples of 128 and cast weights to bf16 ONCE.

    Call at parameter-init time; pass the padded params to every forward.
    Zero K-padding leaves both matmuls mathematically unchanged.
    """
    d_in, d_hid = w1.shape
    d_hid2, d_out = w2.shape
    assert d_hid2 == d_hid
    d_in_p, d_hid_p, d_out_p = (_round_up(d, 128) for d in (d_in, d_hid, d_out))

    def pad2(a, rows, cols, dtype):
        a = a.reshape((-1, a.shape[-1]))
        if a.shape != (rows, cols):
            a = jnp.pad(a, ((0, rows - a.shape[0]), (0, cols - a.shape[1])))
        return a.astype(dtype)

    w1_p = pad2(w1, d_in_p, d_hid_p, compute_dtype)
    w2_p = pad2(w2, d_hid_p, d_out_p, compute_dtype)
    b1_p = pad2(b1, 1, d_hid_p, jnp.float32)
    b2_p = pad2(b2, 1, d_out_p, jnp.float32)
    return (w1_p, b1_p, w2_p, b2_p), (d_in, d_hid, d_out)


def sequential_forward_padded(x, w1_p, b1_p, w2_p, b2_p, *, d_out,
                              tile_m=256, compute_dtype=jnp.bfloat16):
    """Fused Sequential(Linear, ReLU, Linear) forward on pre-padded params.

    x: [M, D_in] (unpadded); w1_p/b1_p/w2_p/b2_p from `pad_sequential_params`.
    Returns [M, d_out] in x.dtype.
    """
    M, d_in = x.shape
    d_in_p, d_hid_p = w1_p.shape
    d_hid_p2, d_out_p = w2_p.shape
    assert d_hid_p2 == d_hid_p and d_in_p >= d_in and d_out_p >= d_out
    out_dtype = x.dtype

    # Batch tile: MXU-sized, dtype-aware sublane rounding, never larger than
    # the batch so small problems run as a single grid step along M.
    sub = _sublane_multiple(compute_dtype)
    tile_m_eff = min(tile_m, _round_up(M, sub))
    m_p = _round_up(M, tile_m_eff)
    m_tiles = m_p // tile_m_eff

    # Second (column-parallel) grid axis only when the batch grid collapses:
    # shards output columns across v7x's two TensorCores; cheap elsewhere.
    if m_tiles == 1 and d_out_p >= 256 and d_out_p % 256 == 0:
        tile_n = d_out_p // 2
    else:
        tile_n = d_out_p
    n_tiles = d_out_p // tile_n

    # Activation pad only when actually needed (aligned case: cast only).
    if m_p == M and d_in_p == d_in:
        x_p = x.astype(compute_dtype)
    else:
        x_p = jnp.pad(x, ((0, m_p - M), (0, d_in_p - d_in))).astype(compute_dtype)

    # Exact VMEM budget (+25% slack), capped at 80% of this chip's physical
    # VMEM (128 MiB on v5e/v6e, 64 MiB per TC on v7x).
    c_bytes = jnp.dtype(compute_dtype).itemsize
    o_bytes = jnp.dtype(out_dtype).itemsize
    w2_bufs = 1 if n_tiles == 1 else 2
    vmem_bytes = (
        2 * tile_m_eff * d_in_p * c_bytes              # x tile (double-buffered)
        + d_in_p * d_hid_p * c_bytes                   # w1 (resident)
        + d_hid_p * 4                                  # b1 (f32, resident)
        + w2_bufs * d_hid_p * tile_n * c_bytes         # w2 tile(s)
        + w2_bufs * tile_n * 4                         # b2 tile(s)
        + 2 * tile_m_eff * tile_n * o_bytes            # out tile (double-buffered)
        + tile_m_eff * (d_hid_p + tile_n) * 4          # f32 intermediates
    )
    cap = int(0.8 * _physical_vmem_bytes())
    need = int(vmem_bytes * 1.25)
    if need > cap:
        # TODO(synk): streaming fallback (column-tiled w2 + VMEM h scratch)
        # for weights that exceed v7x's per-core VMEM.
        raise ValueError(
            f"fused Sequential kernel needs ~{need} B VMEM but only {cap} B "
            f"are available on this chip; use smaller tiles or a streamed path")
    vmem_limit = min(cap, max(32 * 1024 * 1024, need))

    # Advisory cost hint so XLA schedules surrounding ops around the call.
    flops = 2 * m_p * (d_in_p * d_hid_p * n_tiles + d_hid_p * d_out_p)
    bytes_accessed = (m_p * d_in_p * c_bytes + d_in_p * d_hid_p * c_bytes
                      + d_hid_p * 4 + d_hid_p * d_out_p * c_bytes
                      + d_out_p * 4 + m_p * d_out_p * o_bytes)
    cost = pl.CostEstimate(flops=flops, transcendentals=0,
                           bytes_accessed=bytes_accessed)

    def spec(shape, index_map, single_buffer):
        if single_buffer:
            return pl.BlockSpec(shape, index_map, pipeline_mode=pl.Buffered(1))
        return pl.BlockSpec(shape, index_map)

    out_p = pl.pallas_call(
        sequential_mlp_kernel,
        out_shape=jax.ShapeDtypeStruct((m_p, d_out_p), out_dtype),
        grid_spec=pltpu.PrefetchScalarGridSpec(
            num_scalar_prefetch=0,
            grid=(m_tiles, n_tiles),
            in_specs=[
                # activations: tiled over the batch axis (double-buffered)
                pl.BlockSpec((tile_m_eff, d_in_p), lambda i, j: (i, 0)),
                # w1 / b1: constant across the grid -> single VMEM buffer
                spec((d_in_p, d_hid_p), lambda i, j: (0, 0), True),
                spec((1, d_hid_p), lambda i, j: (0, 0), True),
                # w2 / b2: column-tiled only when the output axis is split
                spec((d_hid_p, tile_n), lambda i, j: (0, j), n_tiles == 1),
                spec((1, tile_n), lambda i, j: (0, j), n_tiles == 1),
            ],
            out_specs=pl.BlockSpec((tile_m_eff, tile_n), lambda i, j: (i, j)),
        ),
        compiler_params=pltpu.CompilerParams(
            dimension_semantics=("parallel", "parallel"),
            vmem_limit_bytes=int(vmem_limit),
        ),
        cost_estimate=cost,
    )(x_p, w1_p, b1_p, w2_p, b2_p)

    # Slice only when padding was actually added.
    if m_p == M and d_out_p == d_out:
        return out_p
    return out_p[:M, :d_out]


def reference_forward(x, w1, b1, w2, b2, compute_dtype=jnp.bfloat16):
    # Same precision recipe as the kernel: bf16 operands, f32 accumulation,
    # f32 bias/ReLU epilogue.
    h = jnp.dot(x.astype(compute_dtype), w1.astype(compute_dtype),
                preferred_element_type=jnp.float32) + b1
    h = jnp.maximum(h, 0.0)
    y = jnp.dot(h.astype(compute_dtype), w2.astype(compute_dtype),
                preferred_element_type=jnp.float32) + b2
    return y.astype(x.dtype)


if __name__ == "__main__":
    # Small shapes implied by the module: Sequential(Linear, ReLU, Linear).
    M, D_IN, D_HID, D_OUT = 16, 32, 64, 32

    key = jax.random.PRNGKey(0)
    kx, k1, kb1, k2, kb2 = jax.random.split(key, 5)

    x = jax.random.normal(kx, (M, D_IN), dtype=jnp.float32)
    # Deterministic, PyTorch-Linear-like init (uniform scaled by 1/sqrt(fan_in)).
    w1 = jax.random.uniform(k1, (D_IN, D_HID), jnp.float32, -1.0, 1.0) / jnp.sqrt(D_IN)
    b1 = jax.random.uniform(kb1, (1, D_HID), jnp.float32, -1.0, 1.0) / jnp.sqrt(D_IN)
    w2 = jax.random.uniform(k2, (D_HID, D_OUT), jnp.float32, -1.0, 1.0) / jnp.sqrt(D_HID)
    b2 = jax.random.uniform(kb2, (1, D_OUT), jnp.float32, -1.0, 1.0) / jnp.sqrt(D_HID)

    # Pad/cast the parameters ONCE (parameter-init time), not per forward.
    (w1_p, b1_p, w2_p, b2_p), (_, _, d_out) = pad_sequential_params(w1, b1, w2, b2)

    fwd = jax.jit(functools.partial(sequential_forward_padded, d_out=d_out))
    out = jax.block_until_ready(fwd(x, w1_p, b1_p, w2_p, b2_p))

    ref = jax.block_until_ready(reference_forward(x, w1, b1, w2, b2))
    assert out.shape == (M, D_OUT)
    assert jnp.allclose(out, ref, atol=2e-2, rtol=2e-2), "mismatch vs reference"

    print("KERNEL_OK")
</pallas_src>

<mosaic_0001>
module attributes {stable_mosaic.version = 11 : i64} {
  func.func @sequential_mlp_kernel(%arg0: i32, %arg1: i32, %arg2: memref<16x128xbf16, #tpu.memory_space<vmem>>, %arg3: memref<128x128xbf16, #tpu.memory_space<vmem>>, %arg4: memref<1x128xf32, #tpu.memory_space<vmem>>, %arg5: memref<128x128xbf16, #tpu.memory_space<vmem>>, %arg6: memref<1x128xf32, #tpu.memory_space<vmem>>, %arg7: memref<16x128xf32, #tpu.memory_space<vmem>>) attributes {dimension_semantics = [#tpu.dimension_semantics<parallel>, #tpu.dimension_semantics<parallel>], iteration_bounds = array<i64: 1, 1>, scalar_prefetch = 0 : i64, scratch_operands = 0 : i64, tpu.core_type = #tpu.core_type<tc>, window_params = [{transform_indices = @transform_0, window_bounds = array<i64: 16, 128>}, {pipeline_mode = #tpu.pipeline_mode<synchronous>, transform_indices = @transform_1, window_bounds = array<i64: 128, 128>}, {pipeline_mode = #tpu.pipeline_mode<synchronous>, transform_indices = @transform_2, window_bounds = array<i64: 1, 128>}, {pipeline_mode = #tpu.pipeline_mode<synchronous>, transform_indices = @transform_3, window_bounds = array<i64: 128, 128>}, {pipeline_mode = #tpu.pipeline_mode<synchronous>, transform_indices = @transform_4, window_bounds = array<i64: 1, 128>}, {transform_indices = @transform_5, window_bounds = array<i64: 16, 128>}]} {
    %c0 = arith.constant 0 : index
    %c0_0 = arith.constant 0 : index
    %0 = vector.load %arg2[%c0, %c0_0] : memref<16x128xbf16, #tpu.memory_space<vmem>>, vector<16x128xbf16>
    %c0_1 = arith.constant 0 : index
    %c0_2 = arith.constant 0 : index
    %1 = vector.load %arg3[%c0_1, %c0_2] : memref<128x128xbf16, #tpu.memory_space<vmem>>, vector<128x128xbf16>
    %cst = arith.constant dense<0.000000e+00> : vector<16x128xf32>
    %2 = tpu.matmul %0, %1, %cst {dimension_numbers = #tpu.dot_dimension_numbers<[1], [0], [0], [1], [0, 0, 1, 1], [], []>} : vector<16x128xbf16>, vector<128x128xbf16>, vector<16x128xf32> -> vector<16x128xf32>
    %c0_3 = arith.constant 0 : index
    %c0_4 = arith.constant 0 : index
    %3 = vector.load %arg4[%c0_3, %c0_4] : memref<1x128xf32, #tpu.memory_space<vmem>>, vector<1x128xf32>
    %4 = vector.broadcast %3 : vector<1x128xf32> to vector<16x128xf32>
    %5 = arith.addf %2, %4 : vector<16x128xf32>
    %cst_5 = arith.constant 0.000000e+00 : f32
    %6 = vector.broadcast %cst_5 : f32 to vector<16x128xf32>
    %7 = arith.maximumf %5, %6 : vector<16x128xf32>
    %8 = arith.truncf %7 : vector<16x128xf32> to vector<16x128xbf16>
    %c0_6 = arith.constant 0 : index
    %c0_7 = arith.constant 0 : index
    %9 = vector.load %arg5[%c0_6, %c0_7] : memref<128x128xbf16, #tpu.memory_space<vmem>>, vector<128x128xbf16>
    %cst_8 = arith.constant dense<0.000000e+00> : vector<16x128xf32>
    %10 = tpu.matmul %8, %9, %cst_8 {dimension_numbers = #tpu.dot_dimension_numbers<[1], [0], [0], [1], [0, 0, 1, 1], [], []>} : vector<16x128xbf16>, vector<128x128xbf16>, vector<16x128xf32> -> vector<16x128xf32>
    %c0_9 = arith.constant 0 : index
    %c0_10 = arith.constant 0 : index
    %11 = vector.load %arg6[%c0_9, %c0_10] : memref<1x128xf32, #tpu.memory_space<vmem>>, vector<1x128xf32>
    %12 = vector.broadcast %11 : vector<1x128xf32> to vector<16x128xf32>
    %13 = arith.addf %10, %12 : vector<16x128xf32>
    %c0_11 = arith.constant 0 : index
    %c0_12 = arith.constant 0 : index
    %14 = vector.load %arg7[%c0_11, %c0_12] : memref<16x128xf32, #tpu.memory_space<vmem>>, vector<16x128xf32>
    tpu.vector_store %arg7[%c0_11, %c0_12], %13 {strides = array<i32>} : memref<16x128xf32, #tpu.memory_space<vmem>>, vector<16x128xf32>,
    return
  }
  func.func @transform_0(%arg0: i32, %arg1: i32) -> (i32, i32) {
    %c0_i32 = arith.constant 0 : i32
    %c0_i32_0 = arith.constant 0 : i32
    return %arg0, %c0_i32 : i32, i32
  }
  func.func @transform_1(%arg0: i32, %arg1: i32) -> (i32, i32) {
    %c0_i32 = arith.constant 0 : i32
    %c0_i32_0 = arith.constant 0 : i32
    %c0_i32_1 = arith.constant 0 : i32
    return %c0_i32, %c0_i32_0 : i32, i32
  }
  func.func @transform_2(%arg0: i32, %arg1: i32) -> (i32, i32) {
    %c0_i32 = arith.constant 0 : i32
    %c0_i32_0 = arith.constant 0 : i32
    %c0_i32_1 = arith.constant 0 : i32
    return %c0_i32, %c0_i32_0 : i32, i32
  }
  func.func @transform_3(%arg0: i32, %arg1: i32) -> (i32, i32) {
    %c0_i32 = arith.constant 0 : i32
    %c0_i32_0 = arith.constant 0 : i32
    return %c0_i32, %arg1 : i32, i32
  }
  func.func @transform_4(%arg0: i32, %arg1: i32) -> (i32, i32) {
    %c0_i32 = arith.constant 0 : i32
    %c0_i32_0 = arith.constant 0 : i32
    return %c0_i32, %arg1 : i32, i32
  }
  func.func @transform_5(%arg0: i32, %arg1: i32) -> (i32, i32) {
    %c0_i32 = arith.constant 0 : i32
    return %arg0, %arg1 : i32, i32
  }
}

</mosaic_0001>

<llo_original>
// kernel: sequential_forward_padded.1
$region0: #{sequential_forward_padded.1}
  #allocation0 [shape = 'u32[]', space=smem, size = 0x4, offset = 0x4, fixed_abs, tag = 'smem constant byte address 0x4 - core index']
  #allocation1 [shape = 'u32[144,128]{1,0:T(1,128)}', space=vmem, size = 0x12000, scoped, tag = 'internal scratch']
  %s0 = inlined_call_operand.vmem [shape: bf16[16,128], index: 0, kind: input, shape index: {}]
  %s1 = inlined_call_operand.hbm [shape: bf16[128,128], index: 1, kind: input, shape index: {}]
  %s2 = inlined_call_operand.vmem [shape: f32[1,128], index: 2, kind: input, shape index: {}]
  %s3 = inlined_call_operand.hbm [shape: bf16[128,128], index: 3, kind: input, shape index: {}]
  %s4 = inlined_call_operand.vmem [shape: f32[1,128], index: 4, kind: input, shape index: {}]
  %s5 = inlined_call_operand.hbm [shape: f32[16,128], index: 5, kind: output, shape index: {}]
  %s6 = sld [smem:[#allocation0]]
  $region38: #{sequential_forward_padded.1} parent=0
    _
  %s8 = ssub.s32 1, %s6
  %s9 = scalar_select 0, %s8, %s6
  $region1: #{sequential_forward_padded.1} parent=0
    #allocation2 [shape = 'u8[32768]{0}', space=vmem, size = 0x8000, scoped, tag = 'input window, operand 1, single buffered']
    #allocation3 [shape = 's32[1]{0}', space=sflag, size = 0x4, scoped, tag = 'scoped memory for sequential_forward_padded.1']
    #allocation4 [shape = 's32[1]{0}', space=sflag, size = 0x4, scoped, tag = 'scoped memory for sequential_forward_padded.1']
    #allocation5 [shape = 'u8[32768]{0}', space=vmem, size = 0x8000, scoped, tag = 'input window, operand 3, single buffered']
    #allocation6 [shape = 's32[1]{0}', space=sflag, size = 0x4, scoped, tag = 'scoped memory for sequential_forward_padded.1']
    #allocation7 [shape = 'u8[8192]{0}', space=vmem, size = 0x2000, scoped, tag = 'output window, operand 0, single buffered']
    %10 = vsyncpa [#allocation3], 0
    %11 = vsyncpa [#allocation6], 0
    %12 = vsyncpa [#allocation4], 0
    // Predicated region
    $region2: #{sequential_forward_padded.1} parent=1 // pred_check
      _
    $region3: #{sequential_forward_padded.1} parent=1 // pred_check_branch
      %14 = sbr.rel (0) target = $region5
    $region4: #{sequential_forward_padded.1} parent=1 // pred_region
      _
    $region5: #{sequential_forward_padded.1} parent=1 // pred_fallthru
      _
    // Predicated region
    $region6: #{sequential_forward_padded.1} parent=1 // pred_check
      _
    $region7: #{sequential_forward_padded.1} parent=1 // pred_check_branch
      %16 = sbr.rel (0) target = $region9
    $region8: #{sequential_forward_padded.1} parent=1 // pred_region
      %s18 = ssub.s32 1024, 1024
      %19 = vsyncadd [#allocation3], %s18
      %s20 = sshll.u32 [#allocation2], 4
      %s21 = int_to_ptr.vmem [resolvable:$true] %s20
      %26 = dma.hbm_to_vmem [thread:$0]  %s1, 1024, %s21, [#allocation3], 64, 64, 4
    $region9: #{sequential_forward_padded.1} parent=1 // pred_fallthru
      _
    // Predicated region
    $region10: #{sequential_forward_padded.1} parent=1 // pred_check
      _
    $region11: #{sequential_forward_padded.1} parent=1 // pred_check_branch
      %28 = sbr.rel (0) target = $region13
    $region12: #{sequential_forward_padded.1} parent=1 // pred_region
      _
    $region13: #{sequential_forward_padded.1} parent=1 // pred_fallthru
      _
    // Predicated region
    $region14: #{sequential_forward_padded.1} parent=1 // pred_check
      _
    $region15: #{sequential_forward_padded.1} parent=1 // pred_check_branch
      %30 = sbr.rel (0) target = $region17
    $region16: #{sequential_forward_padded.1} parent=1 // pred_region
      %s32 = ssub.s32 1024, 1024
      %33 = vsyncadd [#allocation6], %s32
      %s34 = sshll.u32 [#allocation5], 4
      %s35 = int_to_ptr.vmem [resolvable:$true] %s34
      %40 = dma.hbm_to_vmem [thread:$0]  %s3, 1024, %s35, [#allocation6], 64, 64, 4
    $region17: #{sequential_forward_padded.1} parent=1 // pred_fallthru
      _
    // Predicated region
    $region18: #{sequential_forward_padded.1} parent=1 // pred_check
      _
    $region19: #{sequential_forward_padded.1} parent=1 // pred_check_branch
      %42 = sbr.rel (0) target = $region21
    $region20: #{sequential_forward_padded.1} parent=1 // pred_region
      _
    $region21: #{sequential_forward_padded.1} parent=1 // pred_fallthru
      _
    // Predicated region
    $region22: #{sequential_forward_padded.1} parent=1 // pred_check
      _
    $region23: #{sequential_forward_padded.1} parent=1 // pred_check_branch
      %44 = sbr.rel (0) target = $region25
    $region24: #{sequential_forward_padded.1} parent=1 // pred_region
      %45 = dma.done [#allocation3], 1024
    $region25: #{sequential_forward_padded.1} parent=1 // pred_fallthru
      _
    // Predicated region
    $region26: #{sequential_forward_padded.1} parent=1 // pred_check
      _
    $region27: #{sequential_forward_padded.1} parent=1 // pred_check_branch
      %47 = sbr.rel (0) target = $region29
    $region28: #{sequential_forward_padded.1} parent=1 // pred_region
      %48 = dma.done [#allocation6], 1024
    $region29: #{sequential_forward_padded.1} parent=1 // pred_fallthru
      _
    %v50 = vld [vmem:[%s0] sm:$0xf]
    %v51 = vld [vmem:[%s0 + $0x4] sm:$0xf]
    %v52 = vld [vmem:[#allocation2] sm:$0xf]
    %v53 = vld [vmem:[#allocation2 + $0x4] sm:$0xf]
    %v54 = vld [vmem:[#allocation2 + $0x8] sm:$0xf]
    %v55 = vld [vmem:[#allocation2 + $0xc] sm:$0xf]
    %v56 = vld [vmem:[#allocation2 + $0x10] sm:$0xf]
    %v57 = vld [vmem:[#allocation2 + $0x14] sm:$0xf]
    %v58 = vld [vmem:[#allocation2 + $0x18] sm:$0xf]
    %v59 = vld [vmem:[#allocation2 + $0x1c] sm:$0xf]
    %v60 = vld [vmem:[#allocation2 + $0x20] sm:$0xf]
    %v61 = vld [vmem:[#allocation2 + $0x24] sm:$0xf]
    %v62 = vld [vmem:[#allocation2 + $0x28] sm:$0xf]
    %v63 = vld [vmem:[#allocation2 + $0x2c] sm:$0xf]
    %v64 = vld [vmem:[#allocation2 + $0x30] sm:$0xf]
    %v65 = vld [vmem:[#allocation2 + $0x34] sm:$0xf]
    %v66 = vld [vmem:[#allocation2 + $0x38] sm:$0xf]
    %v67 = vld [vmem:[#allocation2 + $0x3c] sm:$0xf]
    %v68 = vld [vmem:[%s2] sm:$0x1]
    %v70 = vlaneseq
    %v71 = vshrl.u32 %v70, 7
    %v72 = vsub.s32 0, %v71
    %v73 = vrot.slane %v68, %v72
    %v77 = vunpack.c.l.b16 %v50
    %v78 = vunpack.c.l.b16 %v51
    %v79 = vpack.c.b16 %v78, %v77
    %v97 = vunpack.c.l.b16 %v52
    %v98 = vunpack.c.l.b16 %v53
    %v99 = vunpack.c.l.b16 %v54
    %v100 = vunpack.c.l.b16 %v55
    %v101 = vunpack.c.l.b16 %v56
    %v102 = vunpack.c.l.b16 %v57
    %v103 = vunpack.c.l.b16 %v58
    %v104 = vunpack.c.l.b16 %v59
    %v105 = vunpack.c.l.b16 %v60
    %v106 = vunpack.c.l.b16 %v61
    %v107 = vunpack.c.l.b16 %v62
    %v108 = vunpack.c.l.b16 %v63
    %v109 = vunpack.c.l.b16 %v64
    %v110 = vunpack.c.l.b16 %v65
    %v111 = vunpack.c.l.b16 %v66
    %v112 = vunpack.c.l.b16 %v67
    %v113 = vpack.c.b16 %v98, %v97
    %v114 = vpack.c.b16 %v100, %v99
    %v115 = vpack.c.b16 %v102, %v101
    %v116 = vpack.c.b16 %v104, %v103
    %v117 = vpack.c.b16 %v106, %v105
    %v118 = vpack.c.b16 %v108, %v107
    %v119 = vpack.c.b16 %v110, %v109
    %v120 = vpack.c.b16 %v112, %v111
    %129 = vmatprep.subr.bf16.mxu0 0
    %130 = vmatpush1.bf16.msra.mxu0 %v113
    %131 = vmatprep.subr.bf16.mxu0 0
    %132 = vmatpush1.bf16.msra.mxu0 %v114
    %133 = vmatprep.subr.bf16.mxu0 0
    %134 = vmatpush1.bf16.msra.mxu0 %v115
    %135 = vmatprep.subr.bf16.mxu0 0
    %136 = vmatpush1.bf16.msra.mxu0 %v116
    %137 = vmatprep.subr.bf16.mxu0 0
    %138 = vmatpush1.bf16.msra.mxu0 %v117
    %139 = vmatprep.subr.bf16.mxu0 0
    %140 = vmatpush1.bf16.msra.mxu0 %v118
    %141 = vmatprep.subr.bf16.mxu0 0
    %142 = vmatpush1.bf16.msra.mxu0 %v119
    %143 = vmatprep.subr.bf16.mxu0 0
    %144 = vmatpush1.bf16.msra.mxu0 %v120
    %145 = vmatprep.subr.bf16.mxu0 0
    %146 = vmatpush1.bf16.msra.mxu0 0
    %147 = vmatprep.subr.bf16.mxu0 0
    %148 = vmatpush1.bf16.msra.mxu0 0
    %149 = vmatprep.subr.bf16.mxu0 0
    %150 = vmatpush1.bf16.msra.mxu0 0
    %151 = vmatprep.subr.bf16.mxu0 0
    %152 = vmatpush1.bf16.msra.mxu0 0
    %153 = vmatprep.subr.bf16.mxu0 0
    %154 = vmatpush1.bf16.msra.mxu0 0
    %155 = vmatprep.subr.bf16.mxu0 0
    %156 = vmatpush1.bf16.msra.mxu0 0
    %157 = vmatprep.subr.bf16.mxu0 0
    %158 = vmatpush1.bf16.msra.mxu0 0
    %159 = vmatprep.subr.bf16.mxu0 0
    %160 = vmatpush1.bf16.msra.mxu0 0
    %161 = vmatprep.mubr.bf16.mxu0 0
    %162 = vmatmul.mubr.bf16.gmra.mrb[0].mxu0 %v79
    %v163 = vpop.f32.mrb[0].mxu0
    %v164 = vadd.f32 %v73, %v163
    %v165 = vpop.f32.mrb[0].mxu0
    %v166 = vpop.f32.mrb[0].mxu0
    %v167 = vadd.f32 %v73, %v166
    %v168 = vpop.f32.mrb[0].mxu0
    %169 = vdwg.mxu0
    %v170 = vmax.f32 %v164, 0.0
    %v171 = vmax.f32 %v167, 0.0
    %v172 = vpack.c.bf16 %v171, %v170
    %v173 = vld [vmem:[#allocation5] sm:$0xf]
    %v174 = vld [vmem:[#allocation5 + $0x4] sm:$0xf]
    %v175 = vld [vmem:[#allocation5 + $0x8] sm:$0xf]
    %v176 = vld [vmem:[#allocation5 + $0xc] sm:$0xf]
    %v177 = vld [vmem:[#allocation5 + $0x10] sm:$0xf]
    %v178 = vld [vmem:[#allocation5 + $0x14] sm:$0xf]
    %v179 = vld [vmem:[#allocation5 + $0x18] sm:$0xf]
    %v180 = vld [vmem:[#allocation5 + $0x1c] sm:$0xf]
    %v181 = vld [vmem:[#allocation5 + $0x20] sm:$0xf]
    %v182 = vld [vmem:[#allocation5 + $0x24] sm:$0xf]
    %v183 = vld [vmem:[#allocation5 + $0x28] sm:$0xf]
    %v184 = vld [vmem:[#allocation5 + $0x2c] sm:$0xf]
    %v185 = vld [vmem:[#allocation5 + $0x30] sm:$0xf]
    %v186 = vld [vmem:[#allocation5 + $0x34] sm:$0xf]
    %v187 = vld [vmem:[#allocation5 + $0x38] sm:$0xf]
    %v188 = vld [vmem:[#allocation5 + $0x3c] sm:$0xf]
    %v189 = vld [vmem:[%s4] sm:$0x1]
    %v191 = vlaneseq
    %v192 = vshrl.u32 %v191, 7
    %v193 = vsub.s32 0, %v192
    %v194 = vrot.slane %v189, %v193
    %v212 = vunpack.c.l.b16 %v173
    %v213 = vunpack.c.l.b16 %v174
    %v214 = vunpack.c.l.b16 %v175
    %v215 = vunpack.c.l.b16 %v176
    %v216 = vunpack.c.l.b16 %v177
    %v217 = vunpack.c.l.b16 %v178
    %v218 = vunpack.c.l.b16 %v179
    %v219 = vunpack.c.l.b16 %v180
    %v220 = vunpack.c.l.b16 %v181
    %v221 = vunpack.c.l.b16 %v182
    %v222 = vunpack.c.l.b16 %v183
    %v223 = vunpack.c.l.b16 %v184
    %v224 = vunpack.c.l.b16 %v185
    %v225 = vunpack.c.l.b16 %v186
    %v226 = vunpack.c.l.b16 %v187
    %v227 = vunpack.c.l.b16 %v188
    %v228 = vpack.c.b16 %v213, %v212
    %v229 = vpack.c.b16 %v215, %v214
    %v230 = vpack.c.b16 %v217, %v216
    %v231 = vpack.c.b16 %v219, %v218
    %v232 = vpack.c.b16 %v221, %v220
    %v233 = vpack.c.b16 %v223, %v222
    %v234 = vpack.c.b16 %v225, %v224
    %v235 = vpack.c.b16 %v227, %v226
    %244 = vmatprep.subr.bf16.mxu0 0
    %245 = vmatpush1.bf16.msra.mxu0 %v228
    %246 = vmatprep.subr.bf16.mxu0 0
    %247 = vmatpush1.bf16.msra.mxu0 %v229
    %248 = vmatprep.subr.bf16.mxu0 0
    %249 = vmatpush1.bf16.msra.mxu0 %v230
    %250 = vmatprep.subr.bf16.mxu0 0
    %251 = vmatpush1.bf16.msra.mxu0 %v231
    %252 = vmatprep.subr.bf16.mxu0 0
    %253 = vmatpush1.bf16.msra.mxu0 %v232
    %254 = vmatprep.subr.bf16.mxu0 0
    %255 = vmatpush1.bf16.msra.mxu0 %v233
    %256 = vmatprep.subr.bf16.mxu0 0
    %257 = vmatpush1.bf16.msra.mxu0 %v234
    %258 = vmatprep.subr.bf16.mxu0 0
    %259 = vmatpush1.bf16.msra.mxu0 %v235
    %260 = vmatprep.subr.bf16.mxu0 0
    %261 = vmatpush1.bf16.msra.mxu0 0
    %262 = vmatprep.subr.bf16.mxu0 0
    %263 = vmatpush1.bf16.msra.mxu0 0
    %264 = vmatprep.subr.bf16.mxu0 0
    %265 = vmatpush1.bf16.msra.mxu0 0
    %266 = vmatprep.subr.bf16.mxu0 0
    %267 = vmatpush1.bf16.msra.mxu0 0
    %268 = vmatprep.subr.bf16.mxu0 0
    %269 = vmatpush1.bf16.msra.mxu0 0
    %270 = vmatprep.subr.bf16.mxu0 0
    %271 = vmatpush1.bf16.msra.mxu0 0
    %272 = vmatprep.subr.bf16.mxu0 0
    %273 = vmatpush1.bf16.msra.mxu0 0
    %274 = vmatprep.subr.bf16.mxu0 0
    %275 = vmatpush1.bf16.msra.mxu0 0
    %276 = vmatprep.mubr.bf16.mxu0 0
    %277 = vmatmul.mubr.bf16.gmra.mrb[0].mxu0 %v172
    %v278 = vpop.f32.mrb[0].mxu0
    %v279 = vadd.f32 %v194, %v278
    %v280 = vpop.f32.mrb[0].mxu0
    %v281 = vpop.f32.mrb[0].mxu0
    %v282 = vadd.f32 %v194, %v281
    %v283 = vpop.f32.mrb[0].mxu0
    %284 = vdwg.mxu0
    %285 = vst [vmem:[#allocation7] sm:$0xff] %v279
    %286 = vst [vmem:[#allocation7 + $0x8] sm:$0xff] %v282
    // Predicated region
    $region30: #{sequential_forward_padded.1} parent=1 // pred_check
      _
    $region31: #{sequential_forward_padded.1} parent=1 // pred_check_branch
      %288 = sbr.rel (0) target = $region33
    $region32: #{sequential_forward_padded.1} parent=1 // pred_region
      %s290 = ssub.s32 256, 256
      %291 = vsyncadd [#allocation4], %s290
      %s292 = sshll.u32 [#allocation7], 4
      %s293 = int_to_ptr.vmem [resolvable:$true] %s292
      %298 = dma.vmem_to_hbm [thread:$0]  %s293, 256, %s5, [#allocation4], 128, 128, 8
    $region33: #{sequential_forward_padded.1} parent=1 // pred_fallthru
      _
    // Predicated region
    $region34: #{sequential_forward_padded.1} parent=1 // pred_check
      _
    $region35: #{sequential_forward_padded.1} parent=1 // pred_check_branch
      %300 = sbr.rel (0) target = $region37
    $region36: #{sequential_forward_padded.1} parent=1 // pred_region
      %301 = dma.done [#allocation4], 256
    $region37: #{sequential_forward_padded.1} parent=1 // pred_fallthru
      _
    %302 = vsyncpa [#allocation3], 1
    %303 = vsyncpa [#allocation6], 1
    %304 = vsyncpa [#allocation4], 1

</llo_original>
